<compile_context>
chip_gen: v7x
topology: tpu7x:2x2x1
jax: 0.10.0
libtpu: 0.0.40
codegen_flags: <defaults>
</compile_context>

<pallas_src>
import jax
import jax.numpy as jnp
from jax.experimental import pallas as pl
from jax.experimental.pallas import tpu as pltpu


def _pick_tile(dim, target, align):
    """Largest multiple of `align` <= target that divides `dim`; else full dim."""
    if dim <= target:
        return dim
    t = (target // align) * align
    while t >= align:
        if dim % t == 0:
            return t
        t -= align
    return dim


def _vmem_usage_bytes(tc, tt, tk, C, itm):
    """Estimated VMEM working set: double-buffered input blocks + f32 output block."""
    in_block = (tc * tk + tk * tt + tc * C + C * tt) * itm + (tt + tc) * 4
    out_block = tc * tt * 4
    return 2 * (in_block + out_block)


def _vmem_budget_bytes():
    """Generation-aware VMEM budget with ~20% headroom for internal scratch."""
    try:
        cap = int(pltpu.get_tpu_info().vmem_capacity_bytes)
    except Exception:
        cap = 64 * 2 ** 20          # conservative fallback (v7x per-core VMEM)
    return int(cap * 0.78)          # ~50 MiB on v7x, ~100 MiB on v5e/v6e


def _choose_tiles(C, T, itm, budget):
    """Pick (tc, tt, tk): start big (maximize W1 / x-col reuse), shrink until the
    double-buffered working set fits the VMEM budget.  Shrink order: tk (no
    HBM-reuse impact), then tt, then tc."""
    tc_t, tt_t, tk_t = 512, 1024, 1024
    while True:
        tc = _pick_tile(C, tc_t, 16)            # 16: bf16 sublane packing
        if tc == C and C > tc_t:
            tc = _pick_tile(C, tc_t, 8)         # alignment fallback
        tt = _pick_tile(T, tt_t, 128)
        tk = _pick_tile(T, tk_t, 128)
        if _vmem_usage_bytes(tc, tt, tk, C, itm) <= budget:
            return tc, tt, tk
        if tk_t > 128:
            tk_t //= 2
        elif tt_t > 128:
            tt_t //= 2
        elif tc_t > 16:
            tc_t //= 2
        else:
            # TODO(synk): chunk the fc2 contraction over C (extra grid axis or
            # manual DMA) when the resident (tc,C)/(C,tt) slabs alone exceed the
            # VMEM budget (very large C).
            return tc, tt, tk


def t2dcr_kernel(xr_ref, w1t_ref, b1_ref, w2_ref, b2_ref, xc_ref, out_ref):
    k = pl.program_id(2)

    @pl.when(k == 0)
    def _init():
        out_ref[...] = jnp.zeros_like(out_ref)

    # fc1 partial product in canonical (m,k)x(k,n) form; W1 was pre-transposed
    # on the host, so no in-kernel transpose is needed.  Accumulate directly
    # into the resident f32 output block (no scratch accumulator).
    out_ref[...] += jnp.dot(xr_ref[...], w1t_ref[...],
                            preferred_element_type=jnp.float32)

    @pl.when(k == pl.num_programs(2) - 1)
    def _finalize():
        # fc1 branch: bias + ReLU in f32 on the VPU.
        x1 = jnp.maximum(out_ref[...] + b1_ref[...], 0.0)            # (tc, tt)
        # fc2 branch rewritten in (C, T) space (transpose removed algebraically):
        #   relu(x^T @ W2^T + b2)^T == relu(W2 @ x + b2[:, None])
        y2 = jnp.dot(w2_ref[...], xc_ref[...],
                     preferred_element_type=jnp.float32)              # (tc, tt)
        x2 = jnp.maximum(y2 + b2_ref[...], 0.0)
        out_ref[...] = x1 + x2


def t2dcr_prepare_params(w1, b1, w2, b2, matmul_dtype=jnp.bfloat16):
    """One-time parameter prep (cast + W1 transpose), hoisted out of the hot path."""
    T = w1.shape[0]
    C = w2.shape[0]
    assert w1.shape == (T, T) and b1.shape == (T,)
    assert w2.shape == (C, C) and b2.shape == (C,)
    w1t = w1.astype(matmul_dtype).T                   # (T, T), canonical (k, n)
    w2m = w2.astype(matmul_dtype)                     # (C, C)
    b1_2d = b1.astype(jnp.float32).reshape(1, T)      # broadcast over rows
    b2_2d = b2.astype(jnp.float32).reshape(C, 1)      # broadcast over lanes
    return w1t, b1_2d, w2m, b2_2d


def t2dcr_apply(x, params, *, matmul_dtype=jnp.bfloat16):
    """x: (C, T); params from t2dcr_prepare_params.  Returns f32 (C, T)."""
    w1t, b1_2d, w2m, b2_2d = params
    C, T = x.shape
    assert w1t.shape == (T, T) and b1_2d.shape == (1, T)
    assert w2m.shape == (C, C) and b2_2d.shape == (C, 1)

    itm = jnp.dtype(matmul_dtype).itemsize
    vmem_budget = _vmem_budget_bytes()
    tc, tt, tk = _choose_tiles(C, T, itm, vmem_budget)

    xm = x.astype(matmul_dtype) if x.dtype != matmul_dtype else x

    gi, gj, gk = C // tc, T // tt, T // tk
    grid = (gi, gj, gk)

    cost = pl.CostEstimate(
        flops=2 * C * T * T + 2 * C * C * T,
        transcendentals=0,
        bytes_accessed=int(C * T * itm * gj       # x row slabs (re-read per j)
                           + T * T * itm * gi     # W1^T        (re-read per i)
                           + C * T * itm * gi     # x col slabs (re-read per i)
                           + C * C * itm          # W2 row slabs
                           + (T + C) * 4          # biases
                           + C * T * 4))          # output write

    def build_and_call(single_buffer_fc2):
        fc2_kw = {"pipeline_mode": pl.Buffered(1)} if single_buffer_fc2 else {}
        in_specs = [
            pl.BlockSpec((tc, tk), lambda i, j, k: (i, k)),            # x rows  (fc1 lhs)
            pl.BlockSpec((tk, tt), lambda i, j, k: (k, j)),            # W1^T    (fc1 rhs)
            pl.BlockSpec((1, tt), lambda i, j, k: (0, j)),             # b1
            pl.BlockSpec((tc, C), lambda i, j, k: (i, 0), **fc2_kw),   # W2 rows (changes with i only)
            pl.BlockSpec((tc, 1), lambda i, j, k: (i, 0)),             # b2
            pl.BlockSpec((C, tt), lambda i, j, k: (0, j), **fc2_kw),   # x cols  (changes with j; with
        ]                                                              #  tc<=512, C//tc is usually 1
        return pl.pallas_call(                                         #  so no per-i re-read)
            t2dcr_kernel,
            out_shape=jax.ShapeDtypeStruct((C, T), jnp.float32),
            grid_spec=pltpu.PrefetchScalarGridSpec(
                num_scalar_prefetch=0,
                grid=grid,
                in_specs=in_specs,
                out_specs=pl.BlockSpec((tc, tt), lambda i, j, k: (i, j)),
            ),
            compiler_params=pltpu.CompilerParams(
                dimension_semantics=("parallel", "parallel", "arbitrary"),
                vmem_limit_bytes=vmem_budget),
            cost_estimate=cost,
        )(xm, w1t, b1_2d, w2m, b2_2d, xm)

    try:
        return build_and_call(True)
    except Exception:
        # Fallback for JAX versions where per-BlockSpec pipeline_mode /
        # Buffered(1) is not supported by the top-level pallas_call pipeline.
        return build_and_call(False)


def t2dcr_forward(x, w1, b1, w2, b2, *, matmul_dtype=jnp.bfloat16):
    params = t2dcr_prepare_params(w1, b1, w2, b2, matmul_dtype)
    return t2dcr_apply(x, params, matmul_dtype=matmul_dtype)


def t2dcr_reference(x, w1, b1, w2, b2, matmul_dtype=jnp.bfloat16):
    """Mirrors the PyTorch formulation (with transposes) and the kernel's
    bf16-input / f32-accumulate matmul precision."""
    xm = x.astype(matmul_dtype)
    w1m = w1.astype(matmul_dtype)
    w2m = w2.astype(matmul_dtype)
    x_1 = jax.nn.relu(jnp.dot(xm, w1m.T, preferred_element_type=jnp.float32) + b1)
    x_2 = jax.nn.relu(jnp.dot(xm.T, w2m.T, preferred_element_type=jnp.float32) + b2)
    return x_1 + x_2.T


if __name__ == "__main__":
    # Small shapes consistent with the module: x is (C, T).
    C, T = 8, 16

    key = jax.random.PRNGKey(0)
    kx, kw1, kb1, kw2, kb2 = jax.random.split(key, 5)

    x = jax.random.normal(kx, (C, T), dtype=jnp.float32)
    # Deterministic synthetic params; shapes match nn.Linear(T, T) and nn.Linear(C, C).
    w1 = jax.random.normal(kw1, (T, T), dtype=jnp.float32) * 0.1
    b1 = jax.random.normal(kb1, (T,), dtype=jnp.float32) * 0.1
    w2 = jax.random.normal(kw2, (C, C), dtype=jnp.float32) * 0.1
    b2 = jax.random.normal(kb2, (C,), dtype=jnp.float32) * 0.1

    out = t2dcr_forward(x, w1, b1, w2, b2)
    out = jax.block_until_ready(out)

    ref = t2dcr_reference(x, w1, b1, w2, b2)
    assert out.shape == (C, T)
    assert jnp.allclose(out, ref, atol=2e-5, rtol=2e-5), "mismatch vs reference"

    print("KERNEL_OK")
</pallas_src>

<mosaic_0001>
module attributes {stable_mosaic.version = 11 : i64} {
  func.func @t2dcr_kernel(%arg0: i32, %arg1: i32, %arg2: i32, %arg3: memref<8x16xbf16, #tpu.memory_space<vmem>>, %arg4: memref<16x16xbf16, #tpu.memory_space<vmem>>, %arg5: memref<1x16xf32, #tpu.memory_space<vmem>>, %arg6: memref<8x8xbf16, #tpu.memory_space<vmem>>, %arg7: memref<8x1xf32, #tpu.memory_space<vmem>>, %arg8: memref<8x16xbf16, #tpu.memory_space<vmem>>, %arg9: memref<8x16xf32, #tpu.memory_space<vmem>>) attributes {dimension_semantics = [#tpu.dimension_semantics<parallel>, #tpu.dimension_semantics<parallel>, #tpu.dimension_semantics<arbitrary>], iteration_bounds = array<i64: 1, 1, 1>, scalar_prefetch = 0 : i64, scratch_operands = 0 : i64, tpu.core_type = #tpu.core_type<tc>, window_params = [{transform_indices = @transform_0, window_bounds = array<i64: 8, 16>}, {transform_indices = @transform_1, window_bounds = array<i64: 16, 16>}, {transform_indices = @transform_2, window_bounds = array<i64: 1, 16>}, {pipeline_mode = #tpu.pipeline_mode<synchronous>, transform_indices = @transform_3, window_bounds = array<i64: 8, 8>}, {transform_indices = @transform_4, window_bounds = array<i64: 8, 1>}, {pipeline_mode = #tpu.pipeline_mode<synchronous>, transform_indices = @transform_5, window_bounds = array<i64: 8, 16>}, {transform_indices = @transform_6, window_bounds = array<i64: 8, 16>}]} {
    %c0_i32 = arith.constant 0 : i32
    %0 = arith.cmpi eq, %arg2, %c0_i32 : i32
    %1 = arith.extui %0 : i1 to i32
    %c0_i32_0 = arith.constant 0 : i32
    %2 = arith.cmpi ne, %1, %c0_i32_0 : i32
    scf.if %2 {
      %cst_10 = arith.constant 0.000000e+00 : f32
      %12 = vector.broadcast %cst_10 : f32 to vector<8x16xf32>
      %c0_11 = arith.constant 0 : index
      %c0_12 = arith.constant 0 : index
      %13 = vector.load %arg9[%c0_11, %c0_12] : memref<8x16xf32, #tpu.memory_space<vmem>>, vector<8x16xf32>
      tpu.vector_store %arg9[%c0_11, %c0_12], %12 {strides = array<i32>} : memref<8x16xf32, #tpu.memory_space<vmem>>, vector<8x16xf32>,
    } else {
    }
    %c0 = arith.constant 0 : index
    %c0_1 = arith.constant 0 : index
    %3 = vector.load %arg9[%c0, %c0_1] : memref<8x16xf32, #tpu.memory_space<vmem>>, vector<8x16xf32>
    %c0_2 = arith.constant 0 : index
    %c0_3 = arith.constant 0 : index
    %4 = vector.load %arg3[%c0_2, %c0_3] : memref<8x16xbf16, #tpu.memory_space<vmem>>, vector<8x16xbf16>
    %c0_4 = arith.constant 0 : index
    %c0_5 = arith.constant 0 : index
    %5 = vector.load %arg4[%c0_4, %c0_5] : memref<16x16xbf16, #tpu.memory_space<vmem>>, vector<16x16xbf16>
    %cst = arith.constant dense<0.000000e+00> : vector<8x16xf32>
    %6 = tpu.matmul %4, %5, %cst {dimension_numbers = #tpu.dot_dimension_numbers<[1], [0], [0], [1], [0, 0, 1, 1], [], []>} : vector<8x16xbf16>, vector<16x16xbf16>, vector<8x16xf32> -> vector<8x16xf32>
    %7 = arith.addf %3, %6 : vector<8x16xf32>
    %c0_6 = arith.constant 0 : index
    %c0_7 = arith.constant 0 : index
    %8 = vector.load %arg9[%c0_6, %c0_7] : memref<8x16xf32, #tpu.memory_space<vmem>>, vector<8x16xf32>
    tpu.vector_store %arg9[%c0_6, %c0_7], %7 {strides = array<i32>} : memref<8x16xf32, #tpu.memory_space<vmem>>, vector<8x16xf32>,
    %c0_i32_8 = arith.constant 0 : i32
    %9 = arith.cmpi eq, %arg2, %c0_i32_8 : i32
    %10 = arith.extui %9 : i1 to i32
    %c0_i32_9 = arith.constant 0 : i32
    %11 = arith.cmpi ne, %10, %c0_i32_9 : i32
    scf.if %11 {
      %c0_10 = arith.constant 0 : index
      %c0_11 = arith.constant 0 : index
      %12 = vector.load %arg9[%c0_10, %c0_11] : memref<8x16xf32, #tpu.memory_space<vmem>>, vector<8x16xf32>
      %c0_12 = arith.constant 0 : index
      %c0_13 = arith.constant 0 : index
      %13 = vector.load %arg5[%c0_12, %c0_13] : memref<1x16xf32, #tpu.memory_space<vmem>>, vector<1x16xf32>
      %14 = vector.broadcast %13 : vector<1x16xf32> to vector<8x16xf32>
      %15 = arith.addf %12, %14 : vector<8x16xf32>
      %cst_14 = arith.constant 0.000000e+00 : f32
      %16 = vector.broadcast %cst_14 : f32 to vector<8x16xf32>
      %17 = arith.maximumf %15, %16 : vector<8x16xf32>
      %c0_15 = arith.constant 0 : index
      %c0_16 = arith.constant 0 : index
      %18 = vector.load %arg6[%c0_15, %c0_16] : memref<8x8xbf16, #tpu.memory_space<vmem>>, vector<8x8xbf16>
      %c0_17 = arith.constant 0 : index
      %c0_18 = arith.constant 0 : index
      %19 = vector.load %arg8[%c0_17, %c0_18] : memref<8x16xbf16, #tpu.memory_space<vmem>>, vector<8x16xbf16>
      %cst_19 = arith.constant dense<0.000000e+00> : vector<8x16xf32>
      %20 = tpu.matmul %18, %19, %cst_19 {dimension_numbers = #tpu.dot_dimension_numbers<[1], [0], [0], [1], [0, 0, 1, 1], [], []>} : vector<8x8xbf16>, vector<8x16xbf16>, vector<8x16xf32> -> vector<8x16xf32>
      %c0_20 = arith.constant 0 : index
      %c0_21 = arith.constant 0 : index
      %21 = vector.load %arg7[%c0_20, %c0_21] : memref<8x1xf32, #tpu.memory_space<vmem>>, vector<8x1xf32>
      %22 = vector.broadcast %21 : vector<8x1xf32> to vector<8x16xf32>
      %23 = arith.addf %20, %22 : vector<8x16xf32>
      %cst_22 = arith.constant 0.000000e+00 : f32
      %24 = vector.broadcast %cst_22 : f32 to vector<8x16xf32>
      %25 = arith.maximumf %23, %24 : vector<8x16xf32>
      %26 = arith.addf %17, %25 : vector<8x16xf32>
      %c0_23 = arith.constant 0 : index
      %c0_24 = arith.constant 0 : index
      %27 = vector.load %arg9[%c0_23, %c0_24] : memref<8x16xf32, #tpu.memory_space<vmem>>, vector<8x16xf32>
      tpu.vector_store %arg9[%c0_23, %c0_24], %26 {strides = array<i32>} : memref<8x16xf32, #tpu.memory_space<vmem>>, vector<8x16xf32>,
    } else {
    }
    return
  }
  func.func @transform_0(%arg0: i32, %arg1: i32, %arg2: i32) -> (i32, i32) {
    %c0_i32 = arith.constant 0 : i32
    return %arg0, %arg2 : i32, i32
  }
  func.func @transform_1(%arg0: i32, %arg1: i32, %arg2: i32) -> (i32, i32) {
    %c0_i32 = arith.constant 0 : i32
    return %arg2, %arg1 : i32, i32
  }
  func.func @transform_2(%arg0: i32, %arg1: i32, %arg2: i32) -> (i32, i32) {
    %c0_i32 = arith.constant 0 : i32
    %c0_i32_0 = arith.constant 0 : i32
    return %c0_i32, %arg1 : i32, i32
  }
  func.func @transform_3(%arg0: i32, %arg1: i32, %arg2: i32) -> (i32, i32) {
    %c0_i32 = arith.constant 0 : i32
    %c0_i32_0 = arith.constant 0 : i32
    return %arg0, %c0_i32 : i32, i32
  }
  func.func @transform_4(%arg0: i32, %arg1: i32, %arg2: i32) -> (i32, i32) {
    %c0_i32 = arith.constant 0 : i32
    %c0_i32_0 = arith.constant 0 : i32
    return %arg0, %c0_i32 : i32, i32
  }
  func.func @transform_5(%arg0: i32, %arg1: i32, %arg2: i32) -> (i32, i32) {
    %c0_i32 = arith.constant 0 : i32
    %c0_i32_0 = arith.constant 0 : i32
    return %c0_i32, %arg1 : i32, i32
  }
  func.func @transform_6(%arg0: i32, %arg1: i32, %arg2: i32) -> (i32, i32) {
    %c0_i32 = arith.constant 0 : i32
    return %arg0, %arg1 : i32, i32
  }
}

module attributes {stable_mosaic.version = 11 : i64} {
  func.func @t2dcr_kernel(%arg0: i32, %arg1: i32, %arg2: i32, %arg3: memref<8x16xbf16, #tpu.memory_space<vmem>>, %arg4: memref<16x16xbf16, #tpu.memory_space<vmem>>, %arg5: memref<1x16xf32, #tpu.memory_space<vmem>>, %arg6: memref<8x8xbf16, #tpu.memory_space<vmem>>, %arg7: memref<8x1xf32, #tpu.memory_space<vmem>>, %arg8: memref<8x16xbf16, #tpu.memory_space<vmem>>, %arg9: memref<8x16xf32, #tpu.memory_space<vmem>>) attributes {dimension_semantics = [#tpu.dimension_semantics<parallel>, #tpu.dimension_semantics<parallel>, #tpu.dimension_semantics<arbitrary>], iteration_bounds = array<i64: 1, 1, 1>, scalar_prefetch = 0 : i64, scratch_operands = 0 : i64, tpu.core_type = #tpu.core_type<tc>, window_params = [{transform_indices = @transform_0, window_bounds = array<i64: 8, 16>}, {transform_indices = @transform_1, window_bounds = array<i64: 16, 16>}, {transform_indices = @transform_2, window_bounds = array<i64: 1, 16>}, {transform_indices = @transform_3, window_bounds = array<i64: 8, 8>}, {transform_indices = @transform_4, window_bounds = array<i64: 8, 1>}, {transform_indices = @transform_5, window_bounds = array<i64: 8, 16>}, {transform_indices = @transform_6, window_bounds = array<i64: 8, 16>}]} {
    %c0_i32 = arith.constant 0 : i32
    %0 = arith.cmpi eq, %arg2, %c0_i32 : i32
    %1 = arith.extui %0 : i1 to i32
    %c0_i32_0 = arith.constant 0 : i32
    %2 = arith.cmpi ne, %1, %c0_i32_0 : i32
    scf.if %2 {
      %cst_10 = arith.constant 0.000000e+00 : f32
      %12 = vector.broadcast %cst_10 : f32 to vector<8x16xf32>
      %c0_11 = arith.constant 0 : index
      %c0_12 = arith.constant 0 : index
      %13 = vector.load %arg9[%c0_11, %c0_12] : memref<8x16xf32, #tpu.memory_space<vmem>>, vector<8x16xf32>
      tpu.vector_store %arg9[%c0_11, %c0_12], %12 {strides = array<i32>} : memref<8x16xf32, #tpu.memory_space<vmem>>, vector<8x16xf32>,
    } else {
    }
    %c0 = arith.constant 0 : index
    %c0_1 = arith.constant 0 : index
    %3 = vector.load %arg9[%c0, %c0_1] : memref<8x16xf32, #tpu.memory_space<vmem>>, vector<8x16xf32>
    %c0_2 = arith.constant 0 : index
    %c0_3 = arith.constant 0 : index
    %4 = vector.load %arg3[%c0_2, %c0_3] : memref<8x16xbf16, #tpu.memory_space<vmem>>, vector<8x16xbf16>
    %c0_4 = arith.constant 0 : index
    %c0_5 = arith.constant 0 : index
    %5 = vector.load %arg4[%c0_4, %c0_5] : memref<16x16xbf16, #tpu.memory_space<vmem>>, vector<16x16xbf16>
    %cst = arith.constant dense<0.000000e+00> : vector<8x16xf32>
    %6 = tpu.matmul %4, %5, %cst {dimension_numbers = #tpu.dot_dimension_numbers<[1], [0], [0], [1], [0, 0, 1, 1], [], []>} : vector<8x16xbf16>, vector<16x16xbf16>, vector<8x16xf32> -> vector<8x16xf32>
    %7 = arith.addf %3, %6 : vector<8x16xf32>
    %c0_6 = arith.constant 0 : index
    %c0_7 = arith.constant 0 : index
    %8 = vector.load %arg9[%c0_6, %c0_7] : memref<8x16xf32, #tpu.memory_space<vmem>>, vector<8x16xf32>
    tpu.vector_store %arg9[%c0_6, %c0_7], %7 {strides = array<i32>} : memref<8x16xf32, #tpu.memory_space<vmem>>, vector<8x16xf32>,
    %c0_i32_8 = arith.constant 0 : i32
    %9 = arith.cmpi eq, %arg2, %c0_i32_8 : i32
    %10 = arith.extui %9 : i1 to i32
    %c0_i32_9 = arith.constant 0 : i32
    %11 = arith.cmpi ne, %10, %c0_i32_9 : i32
    scf.if %11 {
      %c0_10 = arith.constant 0 : index
      %c0_11 = arith.constant 0 : index
      %12 = vector.load %arg9[%c0_10, %c0_11] : memref<8x16xf32, #tpu.memory_space<vmem>>, vector<8x16xf32>
      %c0_12 = arith.constant 0 : index
      %c0_13 = arith.constant 0 : index
      %13 = vector.load %arg5[%c0_12, %c0_13] : memref<1x16xf32, #tpu.memory_space<vmem>>, vector<1x16xf32>
      %14 = vector.broadcast %13 : vector<1x16xf32> to vector<8x16xf32>
      %15 = arith.addf %12, %14 : vector<8x16xf32>
      %cst_14 = arith.constant 0.000000e+00 : f32
      %16 = vector.broadcast %cst_14 : f32 to vector<8x16xf32>
      %17 = arith.maximumf %15, %16 : vector<8x16xf32>
      %c0_15 = arith.constant 0 : index
      %c0_16 = arith.constant 0 : index
      %18 = vector.load %arg6[%c0_15, %c0_16] : memref<8x8xbf16, #tpu.memory_space<vmem>>, vector<8x8xbf16>
      %c0_17 = arith.constant 0 : index
      %c0_18 = arith.constant 0 : index
      %19 = vector.load %arg8[%c0_17, %c0_18] : memref<8x16xbf16, #tpu.memory_space<vmem>>, vector<8x16xbf16>
      %cst_19 = arith.constant dense<0.000000e+00> : vector<8x16xf32>
      %20 = tpu.matmul %18, %19, %cst_19 {dimension_numbers = #tpu.dot_dimension_numbers<[1], [0], [0], [1], [0, 0, 1, 1], [], []>} : vector<8x8xbf16>, vector<8x16xbf16>, vector<8x16xf32> -> vector<8x16xf32>
      %c0_20 = arith.constant 0 : index
      %c0_21 = arith.constant 0 : index
      %21 = vector.load %arg7[%c0_20, %c0_21] : memref<8x1xf32, #tpu.memory_space<vmem>>, vector<8x1xf32>
      %22 = vector.broadcast %21 : vector<8x1xf32> to vector<8x16xf32>
      %23 = arith.addf %20, %22 : vector<8x16xf32>
      %cst_22 = arith.constant 0.000000e+00 : f32
      %24 = vector.broadcast %cst_22 : f32 to vector<8x16xf32>
      %25 = arith.maximumf %23, %24 : vector<8x16xf32>
      %26 = arith.addf %17, %25 : vector<8x16xf32>
      %c0_23 = arith.constant 0 : index
      %c0_24 = arith.constant 0 : index
      %27 = vector.load %arg9[%c0_23, %c0_24] : memref<8x16xf32, #tpu.memory_space<vmem>>, vector<8x16xf32>
      tpu.vector_store %arg9[%c0_23, %c0_24], %26 {strides = array<i32>} : memref<8x16xf32, #tpu.memory_space<vmem>>, vector<8x16xf32>,
    } else {
    }
    return
  }
  func.func @transform_0(%arg0: i32, %arg1: i32, %arg2: i32) -> (i32, i32) {
    %c0_i32 = arith.constant 0 : i32
    return %arg0, %arg2 : i32, i32
  }
  func.func @transform_1(%arg0: i32, %arg1: i32, %arg2: i32) -> (i32, i32) {
    %c0_i32 = arith.constant 0 : i32
    return %arg2, %arg1 : i32, i32
  }
  func.func @transform_2(%arg0: i32, %arg1: i32, %arg2: i32) -> (i32, i32) {
    %c0_i32 = arith.constant 0 : i32
    %c0_i32_0 = arith.constant 0 : i32
    return %c0_i32, %arg1 : i32, i32
  }
  func.func @transform_3(%arg0: i32, %arg1: i32, %arg2: i32) -> (i32, i32) {
    %c0_i32 = arith.constant 0 : i32
    %c0_i32_0 = arith.constant 0 : i32
    return %arg0, %c0_i32 : i32, i32
  }
  func.func @transform_4(%arg0: i32, %arg1: i32, %arg2: i32) -> (i32, i32) {
    %c0_i32 = arith.constant 0 : i32
    %c0_i32_0 = arith.constant 0 : i32
    return %arg0, %c0_i32 : i32, i32
  }
  func.func @transform_5(%arg0: i32, %arg1: i32, %arg2: i32) -> (i32, i32) {
    %c0_i32 = arith.constant 0 : i32
    %c0_i32_0 = arith.constant 0 : i32
    return %c0_i32, %arg1 : i32, i32
  }
  func.func @transform_6(%arg0: i32, %arg1: i32, %arg2: i32) -> (i32, i32) {
    %c0_i32 = arith.constant 0 : i32
    return %arg0, %arg1 : i32, i32
  }
}

</mosaic_0001>

<llo_original>
// kernel: tpu_custom_call.1
$region0: #{tpu_custom_call.1}
  #allocation0 [shape = 'u32[]', space=smem, size = 0x4, offset = 0x4, fixed_abs, tag = 'smem constant byte address 0x4 - core index']
  #allocation1 [shape = 'u32[144,128]{1,0:T(1,128)}', space=vmem, size = 0x12000, scoped, tag = 'internal scratch']
  %s0 = inlined_call_operand.vmem [shape: bf16[8,16], index: 0, kind: input, shape index: {}]
  %s1 = inlined_call_operand.vmem [shape: bf16[16,16], index: 1, kind: input, shape index: {}]
  %s2 = inlined_call_operand.hbm [shape: f32[1,16], index: 2, kind: input, shape index: {}]
  %s3 = inlined_call_operand.vmem [shape: bf16[8,8], index: 3, kind: input, shape index: {}]
  %s4 = inlined_call_operand.vmem [shape: f32[8,1], index: 4, kind: input, shape index: {}]
  %s5 = inlined_call_operand.vmem [shape: bf16[8,16], index: 5, kind: input, shape index: {}]
  %s6 = inlined_call_operand.hbm [shape: f32[8,16], index: 6, kind: output, shape index: {}]
  %s7 = sld [smem:[#allocation0]]
  $region46: #{tpu_custom_call.1} parent=0
    _
  %s9 = ssub.s32 1, %s7
  %s10 = scalar_select 0, %s9, %s7
  $region1: #{tpu_custom_call.1} parent=0
    #allocation2 [shape = 'u8[512]{0}', space=vmem, size = 0x400, scoped, tag = 'input window, operand 2, single buffered']
    #allocation3 [shape = 's32[1]{0}', space=sflag, size = 0x4, scoped, tag = 'scoped memory for tpu_custom_call.1']
    #allocation4 [shape = 's32[1]{0}', space=sflag, size = 0x4, scoped, tag = 'scoped memory for tpu_custom_call.1']
    #allocation5 [shape = 'u8[4096]{0}', space=vmem, size = 0x1000, scoped, tag = 'output window, operand 0, single buffered']
    %11 = vsyncpa [#allocation3], 0
    %12 = vsyncpa [#allocation4], 0
    // Predicated region
    $region2: #{tpu_custom_call.1} parent=1 // pred_check
      _
    $region3: #{tpu_custom_call.1} parent=1 // pred_check_branch
      %14 = sbr.rel (0) target = $region5
    $region4: #{tpu_custom_call.1} parent=1 // pred_region
      _
    $region5: #{tpu_custom_call.1} parent=1 // pred_fallthru
      _
    // Predicated region
    $region6: #{tpu_custom_call.1} parent=1 // pred_check
      _
    $region7: #{tpu_custom_call.1} parent=1 // pred_check_branch
      %16 = sbr.rel (0) target = $region9
    $region8: #{tpu_custom_call.1} parent=1 // pred_region
      _
    $region9: #{tpu_custom_call.1} parent=1 // pred_fallthru
      _
    // Predicated region
    $region10: #{tpu_custom_call.1} parent=1 // pred_check
      _
    $region11: #{tpu_custom_call.1} parent=1 // pred_check_branch
      %18 = sbr.rel (0) target = $region13
    $region12: #{tpu_custom_call.1} parent=1 // pred_region
      %s20 = ssub.s32 16, 16
      %21 = vsyncadd [#allocation3], %s20
      %s23 = sshll.u32 [#allocation2], 4
      %s24 = int_to_ptr.vmem [resolvable:$true] %s23
      %26 = dma.hbm_to_vmem [thread:$0]  %s2, 16, %s24, [#allocation3]
    $region13: #{tpu_custom_call.1} parent=1 // pred_fallthru
      _
    // Predicated region
    $region14: #{tpu_custom_call.1} parent=1 // pred_check
      _
    $region15: #{tpu_custom_call.1} parent=1 // pred_check_branch
      %28 = sbr.rel (0) target = $region17
    $region16: #{tpu_custom_call.1} parent=1 // pred_region
      _
    $region17: #{tpu_custom_call.1} parent=1 // pred_fallthru
      _
    // Predicated region
    $region18: #{tpu_custom_call.1} parent=1 // pred_check
      _
    $region19: #{tpu_custom_call.1} parent=1 // pred_check_branch
      %30 = sbr.rel (0) target = $region21
    $region20: #{tpu_custom_call.1} parent=1 // pred_region
      _
    $region21: #{tpu_custom_call.1} parent=1 // pred_fallthru
      _
    // Predicated region
    $region22: #{tpu_custom_call.1} parent=1 // pred_check
      _
    $region23: #{tpu_custom_call.1} parent=1 // pred_check_branch
      %32 = sbr.rel (0) target = $region25
    $region24: #{tpu_custom_call.1} parent=1 // pred_region
      _
    $region25: #{tpu_custom_call.1} parent=1 // pred_fallthru
      _
    // Predicated region
    $region26: #{tpu_custom_call.1} parent=1 // pred_check
      _
    $region27: #{tpu_custom_call.1} parent=1 // pred_check_branch
      %34 = sbr.rel (0) target = $region29
    $region28: #{tpu_custom_call.1} parent=1 // pred_region
      %35 = dma.done [#allocation3], 16
    $region29: #{tpu_custom_call.1} parent=1 // pred_fallthru
      _
    %p37 = scmp.eq.s32.totalorder 0, 0
    // Predicated region
    $region30: #{tpu_custom_call.1} parent=1 // pred_check
      %p38 = pneg %p37
    $region31: #{tpu_custom_call.1} parent=1 // pred_check_branch
      %40 = sbr.rel (%p38) target = $region33
    $region32: #{tpu_custom_call.1} parent=1 // pred_region
      %vm41 = vcmask 130048
      %42 = vst.msk [vmem:[#allocation5] sm:$0xff] %vm41, 0.0
    $region33: #{tpu_custom_call.1} parent=1 // pred_fallthru
      _
    %v43 = vld [vmem:[#allocation5] sm:$0xff]
    %v44 = vld [vmem:[%s0] sm:$0xf]
    %v45 = vld [vmem:[%s1] sm:$0xf]
    %v46 = vld [vmem:[%s1 + $0x4] sm:$0xf]
    %v49 = vunpack.c.l.b16 %v45
    %v50 = vunpack.c.l.b16 %v46
    %v51 = vpack.c.b16 %v50, %v49
    %vm53 = vcmask 130048
    %v55 = vsel %vm53, %v44, 0
    %57 = vmatprep.subr.bf16.mxu0 0
    %58 = vmatpush1.bf16.msra.mxu0 %v51
    %59 = vmatprep.subr.bf16.mxu0 0
    %60 = vmatpush1.bf16.msra.mxu0 0
    %61 = vmatprep.subr.bf16.mxu0 0
    %62 = vmatpush1.bf16.msra.mxu0 0
    %63 = vmatprep.subr.bf16.mxu0 0
    %64 = vmatpush1.bf16.msra.mxu0 0
    %65 = vmatprep.subr.bf16.mxu0 0
    %66 = vmatpush1.bf16.msra.mxu0 0
    %67 = vmatprep.subr.bf16.mxu0 0
    %68 = vmatpush1.bf16.msra.mxu0 0
    %69 = vmatprep.subr.bf16.mxu0 0
    %70 = vmatpush1.bf16.msra.mxu0 0
    %71 = vmatprep.subr.bf16.mxu0 0
    %72 = vmatpush1.bf16.msra.mxu0 0
    %73 = vmatprep.subr.bf16.mxu0 0
    %74 = vmatpush1.bf16.msra.mxu0 0
    %75 = vmatprep.subr.bf16.mxu0 0
    %76 = vmatpush1.bf16.msra.mxu0 0
    %77 = vmatprep.subr.bf16.mxu0 0
    %78 = vmatpush1.bf16.msra.mxu0 0
    %79 = vmatprep.subr.bf16.mxu0 0
    %80 = vmatpush1.bf16.msra.mxu0 0
    %81 = vmatprep.subr.bf16.mxu0 0
    %82 = vmatpush1.bf16.msra.mxu0 0
    %83 = vmatprep.subr.bf16.mxu0 0
    %84 = vmatpush1.bf16.msra.mxu0 0
    %85 = vmatprep.subr.bf16.mxu0 0
    %86 = vmatpush1.bf16.msra.mxu0 0
    %87 = vmatprep.subr.bf16.mxu0 0
    %88 = vmatpush1.bf16.msra.mxu0 0
    %89 = vmatprep.mubr.bf16.mxu0 0
    %90 = vmatmul.mubr.bf16.gmra.mrb[0].mxu0 %v55
    %v91 = vpop.f32.mrb[0].mxu0
    %v92 = vadd.f32 0.0, %v91
    %v93 = vpop.f32.mrb[0].mxu0
    %v94 = vpop.f32.mrb[0].mxu0
    %v95 = vpop.f32.mrb[0].mxu0
    %96 = vdwg.mxu0
    %v97 = vadd.f32 %v43, %v92
    %98 = vst.msk [vmem:[#allocation5] sm:$0xff] %vm53, %v97
    // Predicated region
    $region34: #{tpu_custom_call.1} parent=1 // pred_check
      %p99 = pneg %p37
    $region35: #{tpu_custom_call.1} parent=1 // pred_check_branch
      %101 = sbr.rel (%p99) target = $region37
    $region36: #{tpu_custom_call.1} parent=1 // pred_region
      %v102 = vld [vmem:[#allocation5] sm:$0xff]
      %v103 = vld [vmem:[#allocation2] sm:$0x1]
      %v105 = vlaneseq
      %v106 = vshrl.u32 %v105, 7
      %v107 = vsub.s32 0, %v106
      %v108 = vrot.slane %v103, %v107
      %v110 = vadd.f32 %v102, %v108
      %v111 = vmax.f32 %v110, 0.0
      %v112 = vld [vmem:[%s3] sm:$0xf]
      %v113 = vld [vmem:[%s5] sm:$0xf]
      %v114 = vld [vmem:[%s4] sm:$0xff]
      %116 = vset.pattern.permute.xlu0 0
      %117 = vperm.xlu0 %116, %v114
      %v118 = vpop.permute.xlu0 %117
      %vm120 = vcmask 64512
      %v122 = vsel %vm120, %v112, 0
      %vm124 = vcmask 1043456
      %v126 = vsel %vm124, %v113, 0
      %128 = vmatprep.subr.bf16.mxu0 0
      %129 = vmatpush1.bf16.msra.mxu0 %v126
      %130 = vmatprep.subr.bf16.mxu0 0
      %131 = vmatpush1.bf16.msra.mxu0 0
      %132 = vmatprep.subr.bf16.mxu0 0
      %133 = vmatpush1.bf16.msra.mxu0 0
      %134 = vmatprep.subr.bf16.mxu0 0
      %135 = vmatpush1.bf16.msra.mxu0 0
      %136 = vmatprep.subr.bf16.mxu0 0
      %137 = vmatpush1.bf16.msra.mxu0 0
      %138 = vmatprep.subr.bf16.mxu0 0
      %139 = vmatpush1.bf16.msra.mxu0 0
      %140 = vmatprep.subr.bf16.mxu0 0
      %141 = vmatpush1.bf16.msra.mxu0 0
      %142 = vmatprep.subr.bf16.mxu0 0
      %143 = vmatpush1.bf16.msra.mxu0 0
      %144 = vmatprep.subr.bf16.mxu0 0
      %145 = vmatpush1.bf16.msra.mxu0 0
      %146 = vmatprep.subr.bf16.mxu0 0
      %147 = vmatpush1.bf16.msra.mxu0 0
      %148 = vmatprep.subr.bf16.mxu0 0
      %149 = vmatpush1.bf16.msra.mxu0 0
      %150 = vmatprep.subr.bf16.mxu0 0
      %151 = vmatpush1.bf16.msra.mxu0 0
      %152 = vmatprep.subr.bf16.mxu0 0
      %153 = vmatpush1.bf16.msra.mxu0 0
      %154 = vmatprep.subr.bf16.mxu0 0
      %155 = vmatpush1.bf16.msra.mxu0 0
      %156 = vmatprep.subr.bf16.mxu0 0
      %157 = vmatpush1.bf16.msra.mxu0 0
      %158 = vmatprep.subr.bf16.mxu0 0
      %159 = vmatpush1.bf16.msra.mxu0 0
      %160 = vmatprep.mubr.bf16.mxu0 0
      %161 = vmatmul.mubr.bf16.gmra.mrb[0].mxu0 %v122
      %v162 = vpop.f32.mrb[0].mxu0
      %v163 = vadd.f32 %v118, %v162
      %v164 = vpop.f32.mrb[0].mxu0
      %v165 = vpop.f32.mrb[0].mxu0
      %v166 = vpop.f32.mrb[0].mxu0
      %167 = vdwg.mxu0
      %v168 = vmax.f32 %v163, 0.0
      %v169 = vadd.f32 %v111, %v168
      %170 = vst.msk [vmem:[#allocation5] sm:$0xff] %vm53, %v169
    $region37: #{tpu_custom_call.1} parent=1 // pred_fallthru
      _
    // Predicated region
    $region38: #{tpu_custom_call.1} parent=1 // pred_check
      _
    $region39: #{tpu_custom_call.1} parent=1 // pred_check_branch
      %172 = sbr.rel (0) target = $region41
    $region40: #{tpu_custom_call.1} parent=1 // pred_region
      %s174 = ssub.s32 128, 128
      %175 = vsyncadd [#allocation4], %s174
      %s177 = sshll.u32 [#allocation5], 4
      %s178 = int_to_ptr.vmem [resolvable:$true] %s177
      %180 = dma.vmem_to_hbm [thread:$0]  %s178, 128, %s6, [#allocation4]
    $region41: #{tpu_custom_call.1} parent=1 // pred_fallthru
      _
    // Predicated region
    $region42: #{tpu_custom_call.1} parent=1 // pred_check
      _
    $region43: #{tpu_custom_call.1} parent=1 // pred_check_branch
      %182 = sbr.rel (0) target = $region45
    $region44: #{tpu_custom_call.1} parent=1 // pred_region
      %183 = dma.done [#allocation4], 128
    $region45: #{tpu_custom_call.1} parent=1 // pred_fallthru
      _
    %184 = vsyncpa [#allocation3], 1
    %185 = vsyncpa [#allocation4], 1

// kernel: tpu_custom_call.1
$region0: #{tpu_custom_call.1}
  #allocation0 [shape = 'u32[]', space=smem, size = 0x4, offset = 0x4, fixed_abs, tag = 'smem constant byte address 0x4 - core index']
  #allocation1 [shape = 'u32[144,128]{1,0:T(1,128)}', space=vmem, size = 0x12000, scoped, tag = 'internal scratch']
  %s0 = inlined_call_operand.vmem [shape: bf16[8,16], index: 0, kind: input, shape index: {}]
  %s1 = inlined_call_operand.vmem [shape: bf16[16,16], index: 1, kind: input, shape index: {}]
  %s2 = inlined_call_operand.hbm [shape: f32[1,16], index: 2, kind: input, shape index: {}]
  %s3 = inlined_call_operand.vmem [shape: bf16[8,8], index: 3, kind: input, shape index: {}]
  %s4 = inlined_call_operand.vmem [shape: f32[8,1], index: 4, kind: input, shape index: {}]
  %s5 = inlined_call_operand.vmem [shape: bf16[8,16], index: 5, kind: input, shape index: {}]
  %s6 = inlined_call_operand.hbm [shape: f32[8,16], index: 6, kind: output, shape index: {}]
  %s7 = sld [smem:[#allocation0]]
  $region46: #{tpu_custom_call.1} parent=0
    _
  %s9 = ssub.s32 1, %s7
  %s10 = scalar_select 0, %s9, %s7
  $region1: #{tpu_custom_call.1} parent=0
    #allocation2 [shape = 'u8[512]{0}', space=vmem, size = 0x400, scoped, tag = 'input window, operand 2, single buffered']
    #allocation3 [shape = 's32[1]{0}', space=sflag, size = 0x4, scoped, tag = 'scoped memory for tpu_custom_call.1']
    #allocation4 [shape = 's32[1]{0}', space=sflag, size = 0x4, scoped, tag = 'scoped memory for tpu_custom_call.1']
    #allocation5 [shape = 'u8[4096]{0}', space=vmem, size = 0x1000, scoped, tag = 'output window, operand 0, single buffered']
    %11 = vsyncpa [#allocation3], 0
    %12 = vsyncpa [#allocation4], 0
    // Predicated region
    $region2: #{tpu_custom_call.1} parent=1 // pred_check
      _
    $region3: #{tpu_custom_call.1} parent=1 // pred_check_branch
      %14 = sbr.rel (0) target = $region5
    $region4: #{tpu_custom_call.1} parent=1 // pred_region
      _
    $region5: #{tpu_custom_call.1} parent=1 // pred_fallthru
      _
    // Predicated region
    $region6: #{tpu_custom_call.1} parent=1 // pred_check
      _
    $region7: #{tpu_custom_call.1} parent=1 // pred_check_branch
      %16 = sbr.rel (0) target = $region9
    $region8: #{tpu_custom_call.1} parent=1 // pred_region
      _
    $region9: #{tpu_custom_call.1} parent=1 // pred_fallthru
      _
    // Predicated region
    $region10: #{tpu_custom_call.1} parent=1 // pred_check
      _
    $region11: #{tpu_custom_call.1} parent=1 // pred_check_branch
      %18 = sbr.rel (0) target = $region13
    $region12: #{tpu_custom_call.1} parent=1 // pred_region
      %s20 = ssub.s32 16, 16
      %21 = vsyncadd [#allocation3], %s20
      %s23 = sshll.u32 [#allocation2], 4
      %s24 = int_to_ptr.vmem [resolvable:$true] %s23
      %26 = dma.hbm_to_vmem [thread:$0]  %s2, 16, %s24, [#allocation3]
    $region13: #{tpu_custom_call.1} parent=1 // pred_fallthru
      _
    // Predicated region
    $region14: #{tpu_custom_call.1} parent=1 // pred_check
      _
    $region15: #{tpu_custom_call.1} parent=1 // pred_check_branch
      %28 = sbr.rel (0) target = $region17
    $region16: #{tpu_custom_call.1} parent=1 // pred_region
      _
    $region17: #{tpu_custom_call.1} parent=1 // pred_fallthru
      _
    // Predicated region
    $region18: #{tpu_custom_call.1} parent=1 // pred_check
      _
    $region19: #{tpu_custom_call.1} parent=1 // pred_check_branch
      %30 = sbr.rel (0) target = $region21
    $region20: #{tpu_custom_call.1} parent=1 // pred_region
      _
    $region21: #{tpu_custom_call.1} parent=1 // pred_fallthru
      _
    // Predicated region
    $region22: #{tpu_custom_call.1} parent=1 // pred_check
      _
    $region23: #{tpu_custom_call.1} parent=1 // pred_check_branch
      %32 = sbr.rel (0) target = $region25
    $region24: #{tpu_custom_call.1} parent=1 // pred_region
      _
    $region25: #{tpu_custom_call.1} parent=1 // pred_fallthru
      _
    // Predicated region
    $region26: #{tpu_custom_call.1} parent=1 // pred_check
      _
    $region27: #{tpu_custom_call.1} parent=1 // pred_check_branch
      %34 = sbr.rel (0) target = $region29
    $region28: #{tpu_custom_call.1} parent=1 // pred_region
      %35 = dma.done [#allocation3], 16
    $region29: #{tpu_custom_call.1} parent=1 // pred_fallthru
      _
    %p37 = scmp.eq.s32.totalorder 0, 0
    // Predicated region
    $region30: #{tpu_custom_call.1} parent=1 // pred_check
      %p38 = pneg %p37
    $region31: #{tpu_custom_call.1} parent=1 // pred_check_branch
      %40 = sbr.rel (%p38) target = $region33
    $region32: #{tpu_custom_call.1} parent=1 // pred_region
      %vm41 = vcmask 130048
      %42 = vst.msk [vmem:[#allocation5] sm:$0xff] %vm41, 0.0
    $region33: #{tpu_custom_call.1} parent=1 // pred_fallthru
      _
    %v43 = vld [vmem:[#allocation5] sm:$0xff]
    %v44 = vld [vmem:[%s0] sm:$0xf]
    %v45 = vld [vmem:[%s1] sm:$0xf]
    %v46 = vld [vmem:[%s1 + $0x4] sm:$0xf]
    %v49 = vunpack.c.l.b16 %v45
    %v50 = vunpack.c.l.b16 %v46
    %v51 = vpack.c.b16 %v50, %v49
    %vm53 = vcmask 130048
    %v55 = vsel %vm53, %v44, 0
    %57 = vmatprep.subr.bf16.mxu0 0
    %58 = vmatpush1.bf16.msra.mxu0 %v51
    %59 = vmatprep.subr.bf16.mxu0 0
    %60 = vmatpush1.bf16.msra.mxu0 0
    %61 = vmatprep.subr.bf16.mxu0 0
    %62 = vmatpush1.bf16.msra.mxu0 0
    %63 = vmatprep.subr.bf16.mxu0 0
    %64 = vmatpush1.bf16.msra.mxu0 0
    %65 = vmatprep.subr.bf16.mxu0 0
    %66 = vmatpush1.bf16.msra.mxu0 0
    %67 = vmatprep.subr.bf16.mxu0 0
    %68 = vmatpush1.bf16.msra.mxu0 0
    %69 = vmatprep.subr.bf16.mxu0 0
    %70 = vmatpush1.bf16.msra.mxu0 0
    %71 = vmatprep.subr.bf16.mxu0 0
    %72 = vmatpush1.bf16.msra.mxu0 0
    %73 = vmatprep.subr.bf16.mxu0 0
    %74 = vmatpush1.bf16.msra.mxu0 0
    %75 = vmatprep.subr.bf16.mxu0 0
    %76 = vmatpush1.bf16.msra.mxu0 0
    %77 = vmatprep.subr.bf16.mxu0 0
    %78 = vmatpush1.bf16.msra.mxu0 0
    %79 = vmatprep.subr.bf16.mxu0 0
    %80 = vmatpush1.bf16.msra.mxu0 0
    %81 = vmatprep.subr.bf16.mxu0 0
    %82 = vmatpush1.bf16.msra.mxu0 0
    %83 = vmatprep.subr.bf16.mxu0 0
    %84 = vmatpush1.bf16.msra.mxu0 0
    %85 = vmatprep.subr.bf16.mxu0 0
    %86 = vmatpush1.bf16.msra.mxu0 0
    %87 = vmatprep.subr.bf16.mxu0 0
    %88 = vmatpush1.bf16.msra.mxu0 0
    %89 = vmatprep.mubr.bf16.mxu0 0
    %90 = vmatmul.mubr.bf16.gmra.mrb[0].mxu0 %v55
    %v91 = vpop.f32.mrb[0].mxu0
    %v92 = vadd.f32 0.0, %v91
    %v93 = vpop.f32.mrb[0].mxu0
    %v94 = vpop.f32.mrb[0].mxu0
    %v95 = vpop.f32.mrb[0].mxu0
    %96 = vdwg.mxu0
    %v97 = vadd.f32 %v43, %v92
    %98 = vst.msk [vmem:[#allocation5] sm:$0xff] %vm53, %v97
    // Predicated region
    $region34: #{tpu_custom_call.1} parent=1 // pred_check
      %p99 = pneg %p37
    $region35: #{tpu_custom_call.1} parent=1 // pred_check_branch
      %101 = sbr.rel (%p99) target = $region37
    $region36: #{tpu_custom_call.1} parent=1 // pred_region
      %v102 = vld [vmem:[#allocation5] sm:$0xff]
      %v103 = vld [vmem:[#allocation2] sm:$0x1]
      %v105 = vlaneseq
      %v106 = vshrl.u32 %v105, 7
      %v107 = vsub.s32 0, %v106
      %v108 = vrot.slane %v103, %v107
      %v110 = vadd.f32 %v102, %v108
      %v111 = vmax.f32 %v110, 0.0
      %v112 = vld [vmem:[%s3] sm:$0xf]
      %v113 = vld [vmem:[%s5] sm:$0xf]
      %v114 = vld [vmem:[%s4] sm:$0xff]
      %116 = vset.pattern.permute.xlu0 0
      %117 = vperm.xlu0 %116, %v114
      %v118 = vpop.permute.xlu0 %117
      %vm120 = vcmask 64512
      %v122 = vsel %vm120, %v112, 0
      %vm124 = vcmask 1043456
      %v126 = vsel %vm124, %v113, 0
      %128 = vmatprep.subr.bf16.mxu0 0
      %129 = vmatpush1.bf16.msra.mxu0 %v126
      %130 = vmatprep.subr.bf16.mxu0 0
      %131 = vmatpush1.bf16.msra.mxu0 0
      %132 = vmatprep.subr.bf16.mxu0 0
      %133 = vmatpush1.bf16.msra.mxu0 0
      %134 = vmatprep.subr.bf16.mxu0 0
      %135 = vmatpush1.bf16.msra.mxu0 0
      %136 = vmatprep.subr.bf16.mxu0 0
      %137 = vmatpush1.bf16.msra.mxu0 0
      %138 = vmatprep.subr.bf16.mxu0 0
      %139 = vmatpush1.bf16.msra.mxu0 0
      %140 = vmatprep.subr.bf16.mxu0 0
      %141 = vmatpush1.bf16.msra.mxu0 0
      %142 = vmatprep.subr.bf16.mxu0 0
      %143 = vmatpush1.bf16.msra.mxu0 0
      %144 = vmatprep.subr.bf16.mxu0 0
      %145 = vmatpush1.bf16.msra.mxu0 0
      %146 = vmatprep.subr.bf16.mxu0 0
      %147 = vmatpush1.bf16.msra.mxu0 0
      %148 = vmatprep.subr.bf16.mxu0 0
      %149 = vmatpush1.bf16.msra.mxu0 0
      %150 = vmatprep.subr.bf16.mxu0 0
      %151 = vmatpush1.bf16.msra.mxu0 0
      %152 = vmatprep.subr.bf16.mxu0 0
      %153 = vmatpush1.bf16.msra.mxu0 0
      %154 = vmatprep.subr.bf16.mxu0 0
      %155 = vmatpush1.bf16.msra.mxu0 0
      %156 = vmatprep.subr.bf16.mxu0 0
      %157 = vmatpush1.bf16.msra.mxu0 0
      %158 = vmatprep.subr.bf16.mxu0 0
      %159 = vmatpush1.bf16.msra.mxu0 0
      %160 = vmatprep.mubr.bf16.mxu0 0
      %161 = vmatmul.mubr.bf16.gmra.mrb[0].mxu0 %v122
      %v162 = vpop.f32.mrb[0].mxu0
      %v163 = vadd.f32 %v118, %v162
      %v164 = vpop.f32.mrb[0].mxu0
      %v165 = vpop.f32.mrb[0].mxu0
      %v166 = vpop.f32.mrb[0].mxu0
      %167 = vdwg.mxu0
      %v168 = vmax.f32 %v163, 0.0
      %v169 = vadd.f32 %v111, %v168
      %170 = vst.msk [vmem:[#allocation5] sm:$0xff] %vm53, %v169
    $region37: #{tpu_custom_call.1} parent=1 // pred_fallthru
      _
    // Predicated region
    $region38: #{tpu_custom_call.1} parent=1 // pred_check
      _
    $region39: #{tpu_custom_call.1} parent=1 // pred_check_branch
      %172 = sbr.rel (0) target = $region41
    $region40: #{tpu_custom_call.1} parent=1 // pred_region
      %s174 = ssub.s32 128, 128
      %175 = vsyncadd [#allocation4], %s174
      %s177 = sshll.u32 [#allocation5], 4
      %s178 = int_to_ptr.vmem [resolvable:$true] %s177
      %180 = dma.vmem_to_hbm [thread:$0]  %s178, 128, %s6, [#allocation4]
    $region41: #{tpu_custom_call.1} parent=1 // pred_fallthru
      _
    // Predicated region
    $region42: #{tpu_custom_call.1} parent=1 // pred_check
      _
    $region43: #{tpu_custom_call.1} parent=1 // pred_check_branch
      %182 = sbr.rel (0) target = $region45
    $region44: #{tpu_custom_call.1} parent=1 // pred_region
      %183 = dma.done [#allocation4], 128
    $region45: #{tpu_custom_call.1} parent=1 // pred_fallthru
      _
    %184 = vsyncpa [#allocation3], 1
    %185 = vsyncpa [#allocation4], 1

</llo_original>
